<compile_context>
chip_gen: v6e
topology: v6e:2x2x1
jax: 0.10.0
libtpu: 0.0.40
codegen_flags: <defaults>
</compile_context>

<pallas_src>
import functools

import numpy as np

import jax
import jax.numpy as jnp
from jax import lax
from jax.experimental import pallas as pl
from jax.experimental.pallas import tpu as pltpu

_INV_SQRT2 = 0.7071067811865475


def _gelu(x):
    # Exact (erf-based) GELU, matching torch.nn.functional.gelu default.
    return 0.5 * x * (1.0 + lax.erf(x * jnp.float32(_INV_SQRT2)))


def _double_conv_kernel(x_ref, m1_ref, g1_ref, b1_ref, m2_ref, g2_ref, b2_ref,
                        out_ref, p1_ref, p2_ref, *,
                        bB, H, W, Cin, Cmid, Cout, residual, eps, mxu_dtype):
    # x_ref : (bB, H, W*Cin)      row-folded input block (bB batch samples)
    # m*_ref: (3, W*C, W*C')      per-dy band matrices (x-padding baked in)
    # g*/b* : (1, W*C')           GroupNorm affine params, tiled over W (f32)
    # p1/p2 : (bB*(H+2), W*C)     f32 scratch: per-sample y-padded folded rows
    f32 = jnp.float32
    Hp = H + 2
    M = bB * Hp            # scratch rows
    Mo = M - 2             # matmul output rows (last 2 rows never needed)
    K1, N1 = W * Cin, W * Cmid
    K2, N2 = W * Cmid, W * Cout

    def conv3x3(p_ref, m_ref, n_lanes):
        # 3 lane-dense matmuls (one per dy); row r = s*Hp + y of the result is
        # the conv output for sample s, image row y (rows y in {H, H+1} of each
        # sample block are harmless garbage and are never read).
        acc = jnp.zeros((Mo, n_lanes), f32)
        for dy in range(3):
            lhs = p_ref[dy:dy + Mo, :].astype(mxu_dtype)   # bf16 MXU inputs
            acc = acc + jnp.dot(lhs, m_ref[dy], preferred_element_type=f32)
        return acc

    def groupnorm1(blk, gamma, beta, c):
        # GroupNorm(num_groups=1) over one sample's (H, W*c) block, f32.
        # Two-pass (centered) variance; affine folded into one scale row.
        n = float(H * W * c)
        mean = jnp.sum(blk) / n
        d = blk - mean
        var = jnp.sum(d * d) / n
        scale = lax.rsqrt(var + eps) * gamma        # (1, W*c)
        return d * scale + beta

    # ---- stage conv1 LHS (zero only the 2 halo rows per sample) -------------
    zrow1 = jnp.zeros((1, K1), f32)
    for s in range(bB):
        base = s * Hp
        p1_ref[base:base + 1, :] = zrow1
        p1_ref[base + H + 1:base + H + 2, :] = zrow1
        p1_ref[base + 1:base + 1 + H, :] = x_ref[s].astype(f32)

    acc1 = conv3x3(p1_ref, m1_ref, N1)

    # ---- GN1 + GELU per sample, stage conv2 LHS ------------------------------
    zrow2 = jnp.zeros((1, K2), f32)
    g1 = g1_ref[...]
    b1 = b1_ref[...]
    for s in range(bB):
        base = s * Hp
        h1 = _gelu(groupnorm1(acc1[base:base + H, :], g1, b1, Cmid))
        p2_ref[base:base + 1, :] = zrow2
        p2_ref[base + H + 1:base + H + 2, :] = zrow2
        p2_ref[base + 1:base + 1 + H, :] = h1

    acc2 = conv3x3(p2_ref, m2_ref, N2)

    # ---- GN2 [-> +x, GELU] per sample, lane-dense store ----------------------
    g2 = g2_ref[...]
    b2 = b2_ref[...]
    for s in range(bB):
        base = s * Hp
        h2 = groupnorm1(acc2[base:base + H, :], g2, b2, Cout)
        if residual:
            # residual requires Cin == Cout; folded lane layouts line up exactly.
            h2 = _gelu(x_ref[s].astype(f32) + h2)
        out_ref[s] = h2.astype(out_ref.dtype)        # (H, W*Cout) dense store


def _fold_weight_to_band(w_hwio, W):
    """(3,3,Ci,Co) HWIO conv weight -> (3, W*Ci, W*Co) per-dy band matrices.

    band[dy, j*Ci+ci, x*Co+co] = w[dy, j-x+1, ci, co] if 0 <= j-x+1 <= 2 (and
    0 <= j < W) else 0, so the x-direction zero padding is baked into the band
    and conv(x)[y] (row-folded over W,C) == sum_dy x_padrow(y+dy-1) @ band[dy].
    """
    kh, kw, Ci, Co = w_hwio.shape
    assert kh == 3 and kw == 3, "DoubleConv uses 3x3 convs"
    band = jnp.zeros((3, W, Ci, W, Co), w_hwio.dtype)
    xs = np.arange(W)
    for dy in range(3):
        for dx in range(3):
            js = xs + dx - 1
            m = (js >= 0) & (js < W)
            band = band.at[dy, js[m], :, xs[m], :].set(w_hwio[dy, dx])
    return band.reshape(3, W * Ci, W * Co)


def _pick_batch_block(B, H, batch_block=None):
    if batch_block is not None:
        assert B % batch_block == 0, "batch_block must divide the batch size"
        return batch_block
    best = 1
    for cand in range(1, B + 1):
        if B % cand:
            continue
        if B > 1 and B // cand < 2:
            continue          # keep >= 2 grid steps so v7x can shard the batch
        if cand * (H + 2) > 512:
            continue          # keep matmul M / scratch VMEM bounded
        best = cand
    return best


def double_conv_nhwc(x_nhwc, w1, g1, b1, w2, g2, b2, *, residual=False,
                     eps=1e-5, band_dtype=jnp.bfloat16, batch_block=None):
    """x_nhwc: (B,H,W,Cin); w1: (3,3,Cin,Cmid); w2: (3,3,Cmid,Cout); g*/b*: (C,)."""
    B, H, W, Cin = x_nhwc.shape
    Cmid = w1.shape[-1]
    Cout = w2.shape[-1]
    if residual:
        assert Cin == Cout, "residual DoubleConv requires in_channels == out_channels"

    bB = _pick_batch_block(B, H, batch_block)
    K1, N1 = W * Cin, W * Cmid
    K2, N2 = W * Cmid, W * Cout
    M = bB * (H + 2)

    # Row-folded operands (layout glue only).  Bands go to bf16 for the MXU;
    # x / affine params stay f32 (elementwise + residual math is f32).
    x_f = x_nhwc.reshape(B, H, K1)
    m1 = _fold_weight_to_band(w1.astype(jnp.float32), W).astype(band_dtype)
    m2 = _fold_weight_to_band(w2.astype(jnp.float32), W).astype(band_dtype)
    g1f = jnp.tile(g1.astype(jnp.float32), W).reshape(1, N1)
    b1f = jnp.tile(b1.astype(jnp.float32), W).reshape(1, N1)
    g2f = jnp.tile(g2.astype(jnp.float32), W).reshape(1, N2)
    b2f = jnp.tile(b2.astype(jnp.float32), W).reshape(1, N2)

    kernel = functools.partial(_double_conv_kernel, bB=bB, H=H, W=W, Cin=Cin,
                               Cmid=Cmid, Cout=Cout, residual=residual, eps=eps,
                               mxu_dtype=band_dtype)

    # VMEM budget: double-buffered x/out blocks + (double-buffered) band
    # matrices + the two f32 scratches; cap below physical VMEM (v7x = 64 MiB).
    band_bytes = jnp.dtype(band_dtype).itemsize
    est = (2 * bB * H * K1 * 4 + 2 * bB * H * N2 * 4
           + 2 * 3 * (K1 * N1 + K2 * N2) * band_bytes
           + M * (K1 + K2) * 4 + 8 * (N1 + N2) * 4)
    try:
        cap = int(pltpu.get_tpu_info().vmem_capacity_bytes * 3 // 4)
    except Exception:
        cap = 48 * 2**20
    vmem_limit = int(min(cap, max(32 * 2**20, 2 * est)))

    out = pl.pallas_call(
        kernel,
        out_shape=jax.ShapeDtypeStruct((B, H, N2), x_nhwc.dtype),
        grid_spec=pltpu.PrefetchScalarGridSpec(
            num_scalar_prefetch=0,
            grid=(B // bB,),
            in_specs=[
                pl.BlockSpec((bB, H, K1), lambda b: (b, 0, 0)),
                pl.BlockSpec((3, K1, N1), lambda b: (0, 0, 0)),
                pl.BlockSpec((1, N1), lambda b: (0, 0)),
                pl.BlockSpec((1, N1), lambda b: (0, 0)),
                pl.BlockSpec((3, K2, N2), lambda b: (0, 0, 0)),
                pl.BlockSpec((1, N2), lambda b: (0, 0)),
                pl.BlockSpec((1, N2), lambda b: (0, 0)),
            ],
            out_specs=pl.BlockSpec((bB, H, N2), lambda b: (b, 0, 0)),
            scratch_shapes=[
                pltpu.VMEM((M, K1), jnp.float32),
                pltpu.VMEM((M, K2), jnp.float32),
            ],
        ),
        compiler_params=pltpu.CompilerParams(
            dimension_semantics=("parallel",),       # batch blocks independent
            vmem_limit_bytes=vmem_limit,
        ),
    )(x_f, m1, g1f, b1f, m2, g2f, b2f)

    return out.reshape(B, H, W, Cout)


def double_conv_nchw(x_nchw, w1_oihw, g1, b1, w2_oihw, g2, b2, *,
                     residual=False, eps=1e-5, band_dtype=jnp.bfloat16,
                     batch_block=None):
    """PyTorch-convention entry point: x NCHW, conv weights OIHW."""
    x_nhwc = jnp.transpose(x_nchw, (0, 2, 3, 1))
    w1 = jnp.transpose(w1_oihw, (2, 3, 1, 0))     # OIHW -> HWIO
    w2 = jnp.transpose(w2_oihw, (2, 3, 1, 0))
    y = double_conv_nhwc(x_nhwc, w1, g1, b1, w2, g2, b2, residual=residual,
                         eps=eps, band_dtype=band_dtype, batch_block=batch_block)
    return jnp.transpose(y, (0, 3, 1, 2))          # back to NCHW


# ---------------- pure-JAX reference (for correctness check) ----------------
def _ref_double_conv_nhwc(x, w1, g1, b1, w2, g2, b2, residual, eps=1e-5):
    def conv(t, w):
        return lax.conv_general_dilated(
            t, w, window_strides=(1, 1), padding="SAME",
            dimension_numbers=("NHWC", "HWIO", "NHWC"))

    def gn(t, g, b):
        mean = jnp.mean(t, axis=(1, 2, 3), keepdims=True)
        var = jnp.mean((t - mean) ** 2, axis=(1, 2, 3), keepdims=True)
        return (t - mean) * lax.rsqrt(var + eps) * g.reshape(1, 1, 1, -1) \
               + b.reshape(1, 1, 1, -1)

    h = _gelu(gn(conv(x, w1), g1, b1))
    h = gn(conv(h, w2), g2, b2)
    if residual:
        h = _gelu(x + h)
    return h


if __name__ == "__main__":
    key = jax.random.PRNGKey(0)

    def make_params(k, Cin, Cmid, Cout):
        ks = jax.random.split(k, 6)
        w1 = 0.2 * jax.random.normal(ks[0], (Cmid, Cin, 3, 3), jnp.float32)  # OIHW
        w2 = 0.2 * jax.random.normal(ks[1], (Cout, Cmid, 3, 3), jnp.float32)
        g1 = 1.0 + 0.1 * jax.random.normal(ks[2], (Cmid,), jnp.float32)
        b1 = 0.1 * jax.random.normal(ks[3], (Cmid,), jnp.float32)
        g2 = 1.0 + 0.1 * jax.random.normal(ks[4], (Cout,), jnp.float32)
        b2 = 0.1 * jax.random.normal(ks[5], (Cout,), jnp.float32)
        return w1, g1, b1, w2, g2, b2

    def check(name, x_nchw, params, residual, band_dtype, batch_block, atol, rtol):
        w1, g1, b1, w2, g2, b2 = params
        y = double_conv_nchw(x_nchw, w1, g1, b1, w2, g2, b2, residual=residual,
                             band_dtype=band_dtype, batch_block=batch_block)
        y = jax.block_until_ready(y)
        x_nhwc = jnp.transpose(x_nchw, (0, 2, 3, 1))
        y_ref = _ref_double_conv_nhwc(
            x_nhwc, jnp.transpose(w1, (2, 3, 1, 0)), g1, b1,
            jnp.transpose(w2, (2, 3, 1, 0)), g2, b2, residual)
        y_ref = jnp.transpose(y_ref, (0, 3, 1, 2))
        err = jnp.max(jnp.abs(y - y_ref))
        assert jnp.allclose(y, y_ref, atol=atol, rtol=rtol), \
            f"mismatch ({name}): max abs diff {err}"

    H = W = 16
    k1, k2, k3, k4 = jax.random.split(key, 4)

    # case 1: DoubleConv(in=4, out=8), non-residual, bf16 MXU path, B=2 (2 grid steps)
    x2 = jax.random.normal(k1, (2, 4, H, W), jnp.float32)          # NCHW
    params_a = make_params(k2, 4, 8, 8)
    check("bf16 non-residual", x2, params_a, False, jnp.bfloat16, None, 5e-2, 5e-2)

    # case 2: DoubleConv(in=4, out=4, residual=True), bf16 MXU path
    params_b = make_params(k3, 4, 4, 4)
    check("bf16 residual", x2, params_b, True, jnp.bfloat16, None, 5e-2, 5e-2)

    # case 3: batch-blocked path (B=4, bB=2 -> 2 grid steps), f32 MXU, tight tol
    x4 = jax.random.normal(k4, (4, 4, H, W), jnp.float32)
    check("f32 batched", x4, params_a, False, jnp.float32, 2, 1e-3, 1e-3)

    print("KERNEL_OK")
</pallas_src>

<mosaic_0001>
module attributes {stable_mosaic.version = 11 : i64} {
  func.func @_double_conv_kernel(%arg0: i32, %arg1: memref<1x16x64xf32, #tpu.memory_space<vmem>>, %arg2: memref<3x64x128xbf16, #tpu.memory_space<vmem>>, %arg3: memref<1x128xf32, #tpu.memory_space<vmem>>, %arg4: memref<1x128xf32, #tpu.memory_space<vmem>>, %arg5: memref<3x128x128xbf16, #tpu.memory_space<vmem>>, %arg6: memref<1x128xf32, #tpu.memory_space<vmem>>, %arg7: memref<1x128xf32, #tpu.memory_space<vmem>>, %arg8: memref<1x16x128xf32, #tpu.memory_space<vmem>>, %arg9: memref<18x64xf32, #tpu.memory_space<vmem>>, %arg10: memref<18x128xf32, #tpu.memory_space<vmem>>) attributes {dimension_semantics = [#tpu.dimension_semantics<parallel>], iteration_bounds = array<i64: 2>, scalar_prefetch = 0 : i64, scratch_operands = 2 : i64, tpu.core_type = #tpu.core_type<tc>, window_params = [{transform_indices = @transform_0, window_bounds = array<i64: 1, 16, 64>}, {pipeline_mode = #tpu.pipeline_mode<synchronous>, transform_indices = @transform_1, window_bounds = array<i64: 3, 64, 128>}, {pipeline_mode = #tpu.pipeline_mode<synchronous>, transform_indices = @transform_2, window_bounds = array<i64: 1, 128>}, {pipeline_mode = #tpu.pipeline_mode<synchronous>, transform_indices = @transform_3, window_bounds = array<i64: 1, 128>}, {pipeline_mode = #tpu.pipeline_mode<synchronous>, transform_indices = @transform_4, window_bounds = array<i64: 3, 128, 128>}, {pipeline_mode = #tpu.pipeline_mode<synchronous>, transform_indices = @transform_5, window_bounds = array<i64: 1, 128>}, {pipeline_mode = #tpu.pipeline_mode<synchronous>, transform_indices = @transform_6, window_bounds = array<i64: 1, 128>}, {transform_indices = @transform_7, window_bounds = array<i64: 1, 16, 128>}]} {
    %cst = arith.constant 0.000000e+00 : f32
    %0 = vector.broadcast %cst : f32 to vector<1x64xf32>
    %c0 = arith.constant 0 : index
    %c0_0 = arith.constant 0 : index
    %1 = vector.load %arg9[%c0, %c0_0] : memref<18x64xf32, #tpu.memory_space<vmem>>, vector<1x64xf32>
    tpu.vector_store %arg9[%c0, %c0_0], %0 {strides = array<i32>} : memref<18x64xf32, #tpu.memory_space<vmem>>, vector<1x64xf32>,
    %c17 = arith.constant 17 : index
    %c0_1 = arith.constant 0 : index
    %2 = vector.load %arg9[%c17, %c0_1] : memref<18x64xf32, #tpu.memory_space<vmem>>, vector<1x64xf32>
    tpu.vector_store %arg9[%c17, %c0_1], %0 {strides = array<i32>} : memref<18x64xf32, #tpu.memory_space<vmem>>, vector<1x64xf32>,
    %c0_2 = arith.constant 0 : index
    %c0_3 = arith.constant 0 : index
    %c0_4 = arith.constant 0 : index
    %3 = vector.load %arg1[%c0_2, %c0_3, %c0_4] : memref<1x16x64xf32, #tpu.memory_space<vmem>>, vector<1x16x64xf32>
    %4 = vector.shape_cast %3 : vector<1x16x64xf32> to vector<16x64xf32>
    %c1 = arith.constant 1 : index
    %c0_5 = arith.constant 0 : index
    %5 = vector.load %arg9[%c1, %c0_5] : memref<18x64xf32, #tpu.memory_space<vmem>>, vector<16x64xf32>
    tpu.vector_store %arg9[%c1, %c0_5], %4 {strides = array<i32>} : memref<18x64xf32, #tpu.memory_space<vmem>>, vector<16x64xf32>,
    %cst_6 = arith.constant 0.000000e+00 : f32
    %6 = vector.broadcast %cst_6 : f32 to vector<16x128xf32>
    %c0_7 = arith.constant 0 : index
    %c0_8 = arith.constant 0 : index
    %7 = vector.load %arg9[%c0_7, %c0_8] : memref<18x64xf32, #tpu.memory_space<vmem>>, vector<16x64xf32>
    %8 = arith.truncf %7 : vector<16x64xf32> to vector<16x64xbf16>
    %c0_9 = arith.constant 0 : index
    %c0_10 = arith.constant 0 : index
    %c0_11 = arith.constant 0 : index
    %9 = vector.load %arg2[%c0_9, %c0_10, %c0_11] : memref<3x64x128xbf16, #tpu.memory_space<vmem>>, vector<1x64x128xbf16>
    %10 = vector.shape_cast %9 : vector<1x64x128xbf16> to vector<64x128xbf16>
    %cst_12 = arith.constant dense<0.000000e+00> : vector<16x128xf32>
    %11 = tpu.matmul %8, %10, %cst_12 {dimension_numbers = #tpu.dot_dimension_numbers<[1], [0], [0], [1], [0, 0, 1, 1], [], []>} : vector<16x64xbf16>, vector<64x128xbf16>, vector<16x128xf32> -> vector<16x128xf32>
    %12 = arith.addf %6, %11 : vector<16x128xf32>
    %c1_13 = arith.constant 1 : index
    %c0_14 = arith.constant 0 : index
    %13 = vector.load %arg9[%c1_13, %c0_14] : memref<18x64xf32, #tpu.memory_space<vmem>>, vector<16x64xf32>
    %14 = arith.truncf %13 : vector<16x64xf32> to vector<16x64xbf16>
    %c1_15 = arith.constant 1 : index
    %c0_16 = arith.constant 0 : index
    %c0_17 = arith.constant 0 : index
    %15 = vector.load %arg2[%c1_15, %c0_16, %c0_17] : memref<3x64x128xbf16, #tpu.memory_space<vmem>>, vector<1x64x128xbf16>
    %16 = vector.shape_cast %15 : vector<1x64x128xbf16> to vector<64x128xbf16>
    %cst_18 = arith.constant dense<0.000000e+00> : vector<16x128xf32>
    %17 = tpu.matmul %14, %16, %cst_18 {dimension_numbers = #tpu.dot_dimension_numbers<[1], [0], [0], [1], [0, 0, 1, 1], [], []>} : vector<16x64xbf16>, vector<64x128xbf16>, vector<16x128xf32> -> vector<16x128xf32>
    %18 = arith.addf %12, %17 : vector<16x128xf32>
    %c2 = arith.constant 2 : index
    %c0_19 = arith.constant 0 : index
    %19 = vector.load %arg9[%c2, %c0_19] : memref<18x64xf32, #tpu.memory_space<vmem>>, vector<16x64xf32>
    %20 = arith.truncf %19 : vector<16x64xf32> to vector<16x64xbf16>
    %c2_20 = arith.constant 2 : index
    %c0_21 = arith.constant 0 : index
    %c0_22 = arith.constant 0 : index
    %21 = vector.load %arg2[%c2_20, %c0_21, %c0_22] : memref<3x64x128xbf16, #tpu.memory_space<vmem>>, vector<1x64x128xbf16>
    %22 = vector.shape_cast %21 : vector<1x64x128xbf16> to vector<64x128xbf16>
    %cst_23 = arith.constant dense<0.000000e+00> : vector<16x128xf32>
    %23 = tpu.matmul %20, %22, %cst_23 {dimension_numbers = #tpu.dot_dimension_numbers<[1], [0], [0], [1], [0, 0, 1, 1], [], []>} : vector<16x64xbf16>, vector<64x128xbf16>, vector<16x128xf32> -> vector<16x128xf32>
    %24 = arith.addf %18, %23 : vector<16x128xf32>
    %cst_24 = arith.constant 0.000000e+00 : f32
    %25 = vector.broadcast %cst_24 : f32 to vector<1x128xf32>
    %c0_25 = arith.constant 0 : index
    %c0_26 = arith.constant 0 : index
    %26 = vector.load %arg3[%c0_25, %c0_26] : memref<1x128xf32, #tpu.memory_space<vmem>>, vector<1x128xf32>
    %c0_27 = arith.constant 0 : index
    %c0_28 = arith.constant 0 : index
    %27 = vector.load %arg4[%c0_27, %c0_28] : memref<1x128xf32, #tpu.memory_space<vmem>>, vector<1x128xf32>
    %28 = vector.shape_cast %24 : vector<16x128xf32> to vector<1x16x128xf32>
    %cst_29 = arith.constant dense<0.000000e+00> : vector<1xf32>
    %29 = vector.multi_reduction <add>, %28, %cst_29 [1, 2] : vector<1x16x128xf32> to vector<1xf32>
    %30 = vector.shape_cast %29 : vector<1xf32> to vector<1x1x1xf32>
    %31 = vector.extract %30[0, 0, 0] : f32 from vector<1x1x1xf32>
    %cst_30 = arith.constant 2.048000e+03 : f32
    %32 = arith.divf %31, %cst_30 : f32
    %33 = vector.broadcast %32 : f32 to vector<16x128xf32>
    %34 = arith.subf %24, %33 : vector<16x128xf32>
    %35 = arith.mulf %34, %34 : vector<16x128xf32>
    %36 = vector.shape_cast %35 : vector<16x128xf32> to vector<1x16x128xf32>
    %cst_31 = arith.constant dense<0.000000e+00> : vector<1xf32>
    %37 = vector.multi_reduction <add>, %36, %cst_31 [1, 2] : vector<1x16x128xf32> to vector<1xf32>
    %38 = vector.shape_cast %37 : vector<1xf32> to vector<1x1x1xf32>
    %39 = vector.extract %38[0, 0, 0] : f32 from vector<1x1x1xf32>
    %cst_32 = arith.constant 2.048000e+03 : f32
    %40 = arith.divf %39, %cst_32 : f32
    %cst_33 = arith.constant 9.99999974E-6 : f32
    %41 = arith.addf %40, %cst_33 : f32
    %42 = math.rsqrt %41 : f32
    %43 = vector.broadcast %42 : f32 to vector<1x128xf32>
    %44 = arith.mulf %43, %26 : vector<1x128xf32>
    %45 = vector.broadcast %44 : vector<1x128xf32> to vector<16x128xf32>
    %46 = arith.mulf %34, %45 : vector<16x128xf32>
    %47 = vector.broadcast %27 : vector<1x128xf32> to vector<16x128xf32>
    %48 = arith.addf %46, %47 : vector<16x128xf32>
    %cst_34 = arith.constant 5.000000e-01 : f32
    %49 = vector.broadcast %cst_34 : f32 to vector<16x128xf32>
    %50 = arith.mulf %49, %48 : vector<16x128xf32>
    %cst_35 = arith.constant 0.707106769 : f32
    %51 = vector.broadcast %cst_35 : f32 to vector<16x128xf32>
    %52 = arith.mulf %48, %51 : vector<16x128xf32>
    %53 = math.erf %52 : vector<16x128xf32>
    %cst_36 = arith.constant 1.000000e+00 : f32
    %54 = vector.broadcast %cst_36 : f32 to vector<16x128xf32>
    %55 = arith.addf %54, %53 : vector<16x128xf32>
    %56 = arith.mulf %50, %55 : vector<16x128xf32>
    %c0_37 = arith.constant 0 : index
    %c0_38 = arith.constant 0 : index
    %57 = vector.load %arg10[%c0_37, %c0_38] : memref<18x128xf32, #tpu.memory_space<vmem>>, vector<1x128xf32>
    tpu.vector_store %arg10[%c0_37, %c0_38], %25 {strides = array<i32>} : memref<18x128xf32, #tpu.memory_space<vmem>>, vector<1x128xf32>,
    %c17_39 = arith.constant 17 : index
    %c0_40 = arith.constant 0 : index
    %58 = vector.load %arg10[%c17_39, %c0_40] : memref<18x128xf32, #tpu.memory_space<vmem>>, vector<1x128xf32>
    tpu.vector_store %arg10[%c17_39, %c0_40], %25 {strides = array<i32>} : memref<18x128xf32, #tpu.memory_space<vmem>>, vector<1x128xf32>,
    %c1_41 = arith.constant 1 : index
    %c0_42 = arith.constant 0 : index
    %59 = vector.load %arg10[%c1_41, %c0_42] : memref<18x128xf32, #tpu.memory_space<vmem>>, vector<16x128xf32>
    tpu.vector_store %arg10[%c1_41, %c0_42], %56 {strides = array<i32>} : memref<18x128xf32, #tpu.memory_space<vmem>>, vector<16x128xf32>,
    %cst_43 = arith.constant 0.000000e+00 : f32
    %60 = vector.broadcast %cst_43 : f32 to vector<16x128xf32>
    %c0_44 = arith.constant 0 : index
    %c0_45 = arith.constant 0 : index
    %61 = vector.load %arg10[%c0_44, %c0_45] : memref<18x128xf32, #tpu.memory_space<vmem>>, vector<16x128xf32>
    %62 = arith.truncf %61 : vector<16x128xf32> to vector<16x128xbf16>
    %c0_46 = arith.constant 0 : index
    %c0_47 = arith.constant 0 : index
    %c0_48 = arith.constant 0 : index
    %63 = vector.load %arg5[%c0_46, %c0_47, %c0_48] : memref<3x128x128xbf16, #tpu.memory_space<vmem>>, vector<1x128x128xbf16>
    %64 = vector.shape_cast %63 : vector<1x128x128xbf16> to vector<128x128xbf16>
    %cst_49 = arith.constant dense<0.000000e+00> : vector<16x128xf32>
    %65 = tpu.matmul %62, %64, %cst_49 {dimension_numbers = #tpu.dot_dimension_numbers<[1], [0], [0], [1], [0, 0, 1, 1], [], []>} : vector<16x128xbf16>, vector<128x128xbf16>, vector<16x128xf32> -> vector<16x128xf32>
    %66 = arith.addf %60, %65 : vector<16x128xf32>
    %c1_50 = arith.constant 1 : index
    %c0_51 = arith.constant 0 : index
    %67 = vector.load %arg10[%c1_50, %c0_51] : memref<18x128xf32, #tpu.memory_space<vmem>>, vector<16x128xf32>
    %68 = arith.truncf %67 : vector<16x128xf32> to vector<16x128xbf16>
    %c1_52 = arith.constant 1 : index
    %c0_53 = arith.constant 0 : index
    %c0_54 = arith.constant 0 : index
    %69 = vector.load %arg5[%c1_52, %c0_53, %c0_54] : memref<3x128x128xbf16, #tpu.memory_space<vmem>>, vector<1x128x128xbf16>
    %70 = vector.shape_cast %69 : vector<1x128x128xbf16> to vector<128x128xbf16>
    %cst_55 = arith.constant dense<0.000000e+00> : vector<16x128xf32>
    %71 = tpu.matmul %68, %70, %cst_55 {dimension_numbers = #tpu.dot_dimension_numbers<[1], [0], [0], [1], [0, 0, 1, 1], [], []>} : vector<16x128xbf16>, vector<128x128xbf16>, vector<16x128xf32> -> vector<16x128xf32>
    %72 = arith.addf %66, %71 : vector<16x128xf32>
    %c2_56 = arith.constant 2 : index
    %c0_57 = arith.constant 0 : index
    %73 = vector.load %arg10[%c2_56, %c0_57] : memref<18x128xf32, #tpu.memory_space<vmem>>, vector<16x128xf32>
    %74 = arith.truncf %73 : vector<16x128xf32> to vector<16x128xbf16>
    %c2_58 = arith.constant 2 : index
    %c0_59 = arith.constant 0 : index
    %c0_60 = arith.constant 0 : index
    %75 = vector.load %arg5[%c2_58, %c0_59, %c0_60] : memref<3x128x128xbf16, #tpu.memory_space<vmem>>, vector<1x128x128xbf16>
    %76 = vector.shape_cast %75 : vector<1x128x128xbf16> to vector<128x128xbf16>
    %cst_61 = arith.constant dense<0.000000e+00> : vector<16x128xf32>
    %77 = tpu.matmul %74, %76, %cst_61 {dimension_numbers = #tpu.dot_dimension_numbers<[1], [0], [0], [1], [0, 0, 1, 1], [], []>} : vector<16x128xbf16>, vector<128x128xbf16>, vector<16x128xf32> -> vector<16x128xf32>
    %78 = arith.addf %72, %77 : vector<16x128xf32>
    %c0_62 = arith.constant 0 : index
    %c0_63 = arith.constant 0 : index
    %79 = vector.load %arg6[%c0_62, %c0_63] : memref<1x128xf32, #tpu.memory_space<vmem>>, vector<1x128xf32>
    %c0_64 = arith.constant 0 : index
    %c0_65 = arith.constant 0 : index
    %80 = vector.load %arg7[%c0_64, %c0_65] : memref<1x128xf32, #tpu.memory_space<vmem>>, vector<1x128xf32>
    %81 = vector.shape_cast %78 : vector<16x128xf32> to vector<1x16x128xf32>
    %cst_66 = arith.constant dense<0.000000e+00> : vector<1xf32>
    %82 = vector.multi_reduction <add>, %81, %cst_66 [1, 2] : vector<1x16x128xf32> to vector<1xf32>
    %83 = vector.shape_cast %82 : vector<1xf32> to vector<1x1x1xf32>
    %84 = vector.extract %83[0, 0, 0] : f32 from vector<1x1x1xf32>
    %cst_67 = arith.constant 2.048000e+03 : f32
    %85 = arith.divf %84, %cst_67 : f32
    %86 = vector.broadcast %85 : f32 to vector<16x128xf32>
    %87 = arith.subf %78, %86 : vector<16x128xf32>
    %88 = arith.mulf %87, %87 : vector<16x128xf32>
    %89 = vector.shape_cast %88 : vector<16x128xf32> to vector<1x16x128xf32>
    %cst_68 = arith.constant dense<0.000000e+00> : vector<1xf32>
    %90 = vector.multi_reduction <add>, %89, %cst_68 [1, 2] : vector<1x16x128xf32> to vector<1xf32>
    %91 = vector.shape_cast %90 : vector<1xf32> to vector<1x1x1xf32>
    %92 = vector.extract %91[0, 0, 0] : f32 from vector<1x1x1xf32>
    %cst_69 = arith.constant 2.048000e+03 : f32
    %93 = arith.divf %92, %cst_69 : f32
    %cst_70 = arith.constant 9.99999974E-6 : f32
    %94 = arith.addf %93, %cst_70 : f32
    %95 = math.rsqrt %94 : f32
    %96 = vector.broadcast %95 : f32 to vector<1x128xf32>
    %97 = arith.mulf %96, %79 : vector<1x128xf32>
    %98 = vector.broadcast %97 : vector<1x128xf32> to vector<16x128xf32>
    %99 = arith.mulf %87, %98 : vector<16x128xf32>
    %100 = vector.broadcast %80 : vector<1x128xf32> to vector<16x128xf32>
    %101 = arith.addf %99, %100 : vector<16x128xf32>
    %c0_71 = arith.constant 0 : index
    %c0_72 = arith.constant 0 : index
    %c0_73 = arith.constant 0 : index
    %102 = vector.load %arg8[%c0_71, %c0_72, %c0_73] : memref<1x16x128xf32, #tpu.memory_space<vmem>>, vector<1x16x128xf32>
    %103 = vector.shape_cast %102 : vector<1x16x128xf32> to vector<16x128xf32>
    %104 = vector.shape_cast %101 : vector<16x128xf32> to vector<1x16x128xf32>
    tpu.vector_store %arg8[%c0_71, %c0_72, %c0_73], %104 {strides = array<i32>} : memref<1x16x128xf32, #tpu.memory_space<vmem>>, vector<1x16x128xf32>,
    return
  }
  func.func @transform_0(%arg0: i32) -> (i32, i32, i32) {
    %c0_i32 = arith.constant 0 : i32
    %c0_i32_0 = arith.constant 0 : i32
    %c0_i32_1 = arith.constant 0 : i32
    return %arg0, %c0_i32, %c0_i32_0 : i32, i32, i32
  }
  func.func @transform_1(%arg0: i32) -> (i32, i32, i32) {
    %c0_i32 = arith.constant 0 : i32
    %c0_i32_0 = arith.constant 0 : i32
    %c0_i32_1 = arith.constant 0 : i32
    %c0_i32_2 = arith.constant 0 : i32
    return %c0_i32, %c0_i32_0, %c0_i32_1 : i32, i32, i32
  }
  func.func @transform_2(%arg0: i32) -> (i32, i32) {
    %c0_i32 = arith.constant 0 : i32
    %c0_i32_0 = arith.constant 0 : i32
    %c0_i32_1 = arith.constant 0 : i32
    return %c0_i32, %c0_i32_0 : i32, i32
  }
  func.func @transform_3(%arg0: i32) -> (i32, i32) {
    %c0_i32 = arith.constant 0 : i32
    %c0_i32_0 = arith.constant 0 : i32
    %c0_i32_1 = arith.constant 0 : i32
    return %c0_i32, %c0_i32_0 : i32, i32
  }
  func.func @transform_4(%arg0: i32) -> (i32, i32, i32) {
    %c0_i32 = arith.constant 0 : i32
    %c0_i32_0 = arith.constant 0 : i32
    %c0_i32_1 = arith.constant 0 : i32
    %c0_i32_2 = arith.constant 0 : i32
    return %c0_i32, %c0_i32_0, %c0_i32_1 : i32, i32, i32
  }
  func.func @transform_5(%arg0: i32) -> (i32, i32) {
    %c0_i32 = arith.constant 0 : i32
    %c0_i32_0 = arith.constant 0 : i32
    %c0_i32_1 = arith.constant 0 : i32
    return %c0_i32, %c0_i32_0 : i32, i32
  }
  func.func @transform_6(%arg0: i32) -> (i32, i32) {
    %c0_i32 = arith.constant 0 : i32
    %c0_i32_0 = arith.constant 0 : i32
    %c0_i32_1 = arith.constant 0 : i32
    return %c0_i32, %c0_i32_0 : i32, i32
  }
  func.func @transform_7(%arg0: i32) -> (i32, i32, i32) {
    %c0_i32 = arith.constant 0 : i32
    %c0_i32_0 = arith.constant 0 : i32
    %c0_i32_1 = arith.constant 0 : i32
    return %arg0, %c0_i32, %c0_i32_0 : i32, i32, i32
  }
}

</mosaic_0001>

<llo_original>
// kernel: tpu_custom_call.1
$region0: #{tpu_custom_call.1}
  #allocation0 [shape = 'u32[]', space=smem, size = 0x4, offset = 0x4, fixed_abs, tag = 'smem constant byte address 0x4 - core index']
  #allocation1 [shape = 'u32[144,128]{1,0:T(1,128)}', space=vmem, size = 0x12000, scoped, tag = 'internal scratch']
  #allocation2 [shape = 'f32[18,64]{1,0:T(8,128)}', space=vmem, size = 0x3000, scoped, tag = 'scratch operand']
  #allocation3 [shape = 'f32[18,128]{1,0:T(8,128)}', space=vmem, size = 0x3000, scoped, tag = 'scratch operand']
  %s0 = inlined_call_operand.hbm [shape: f32[2,16,64], index: 0, kind: input, shape index: {}]
  %s1 = inlined_call_operand.hbm [shape: bf16[3,64,128], index: 1, kind: input, shape index: {}]
  %s2 = inlined_call_operand.vmem [shape: f32[1,128], index: 2, kind: input, shape index: {}]
  %s3 = inlined_call_operand.vmem [shape: f32[1,128], index: 3, kind: input, shape index: {}]
  %s4 = inlined_call_operand.hbm [shape: bf16[3,128,128], index: 4, kind: input, shape index: {}]
  %s5 = inlined_call_operand.vmem [shape: f32[1,128], index: 5, kind: input, shape index: {}]
  %s6 = inlined_call_operand.vmem [shape: f32[1,128], index: 6, kind: input, shape index: {}]
  %s7 = inlined_call_operand.hbm [shape: f32[2,16,128], index: 7, kind: output, shape index: {}]
  %s8 = sld [smem:[#allocation0]]
  $region73: #{tpu_custom_call.1} parent=0
    _
  %s10 = ssub.s32 1, %s8
  %s11 = scalar_select 0, %s10, %s8
  $region1: #{tpu_custom_call.1} parent=0
    #allocation4 [shape = 'u8[16384]{0}', space=vmem, size = 0x4000, scoped, tag = 'input window, operand 0']
    #allocation5 [shape = 's32[2]{0}', space=sflag, size = 0x8, scoped, tag = 'scoped memory for tpu_custom_call.1']
    #allocation6 [shape = 's32[2]{0}', space=sflag, size = 0x8, scoped, tag = 'scoped memory for tpu_custom_call.1']
    #allocation7 [shape = 'u8[49152]{0}', space=vmem, size = 0xc000, scoped, tag = 'input window, operand 1, single buffered']
    #allocation8 [shape = 's32[1]{0}', space=sflag, size = 0x4, scoped, tag = 'scoped memory for tpu_custom_call.1']
    #allocation9 [shape = 'u8[98304]{0}', space=vmem, size = 0x18000, scoped, tag = 'input window, operand 4, single buffered']
    #allocation10 [shape = 'u8[16384]{0}', space=vmem, size = 0x4000, scoped, tag = 'output window, operand 0']
    %12 = vsyncpa [#allocation5], 0
    %s13 = scalar_lea.sflag [#allocation5], 1
    %14 = vsyncpa %s13, 0
    %15 = vsyncpa [#allocation8], 0
    %16 = vsyncpa [#allocation6], 0
    %s17 = scalar_lea.sflag [#allocation6], 1
    %18 = vsyncpa %s17, 0
    loop: start=0, step=1, limit=4
    $region2: #{tpu_custom_call.1} parent=1 // loop_pre_header
      _
    $region3: #{tpu_custom_call.1} parent=1 // loop_header
      %s20 = sphi 0, %s24
      %p21 = scmp.ge.s32.totalorder %s20, 4
      %s30 = sphi 0, %s32
      %s33 = sphi 0, %s30
      %s34 = sphi 0, %s33
      %s50 = sphi 0, %s34
      %s54 = sphi 0, %s54
      %s56 = sphi 0, %s54
      %s57 = sphi 0, %s56
      %s71 = sphi 0, %s57
      %s75 = sphi 0, %s75
      %s77 = sphi 0, %s75
      %s78 = sphi 0, %s77
      %s92 = sphi 0, %s78
      %s96 = sphi 0, %s96
      %s98 = sphi 0, %s96
      %s99 = sphi 0, %s98
      %s113 = sphi 0, %s99
      %s117 = sphi 0, %s117
      %s119 = sphi 0, %s117
      %s120 = sphi 0, %s119
      %s134 = sphi 0, %s120
      %s138 = sphi 0, %s138
      %s140 = sphi 0, %s138
      %s141 = sphi 0, %s140
      %s155 = sphi 0, %s141
      %s159 = sphi 0, %s159
      %s161 = sphi 0, %s159
      %s162 = sphi 0, %s161
      %s176 = sphi 0, %s162
      %s182 = sphi 0, %s184
      %s185 = sphi 0, %s182
      %s186 = sphi 0, %s185
      %s202 = sphi 0, %s186
    $region4: #{tpu_custom_call.1} parent=1 // loop_header_branch
      %23 = sbr.rel (%p21) target = $region8
    $region5: #{tpu_custom_call.1} parent=1 // loop_body
      %s25 = ssub.s32 %s20, 1
      %s26 = ssub.s32 %s20, 2
      %s27 = sadd.s32 %s20, 1
      %s28 = ssub.s32 %s20, %s27
      %p29 = scmp.eq.s32.totalorder %s28, 0
      %s31 = sadd.s32 %s30, 1
      %s32 = scalar_select %p29, %s30, %s31
      %p35 = pneg %p29
      %p36 = scmp.eq.s32.totalorder %s20, 1
      %p37 = por %p35, %p36
      %p38 = scmp.ne.s32.totalorder %s30, %s33
      %p39 = scmp.eq.s32.totalorder %s20, 0
      %p40 = por %p38, %p39
      %p41 = scmp.ne.s32.totalorder %s30, %s33
      %p42 = scmp.eq.s32.totalorder %s25, 1
      %p43 = por %p41, %p42
      %p44 = scmp.ne.s32.totalorder %s33, %s34
      %p45 = scmp.eq.s32.totalorder %s25, 0
      %p46 = por %p44, %p45
      %p47 = scmp.ne.s32.totalorder %s33, %s34
      %p48 = scmp.eq.s32.totalorder %s26, 1
      %p49 = por %p47, %p48
      %p51 = scmp.ne.s32.totalorder %s34, %s50
      %p52 = scmp.eq.s32.totalorder %s26, 0
      %p53 = por %p51, %p52
      %s55 = sadd.s32 %s54, 1
      %p58 = scmp.eq.s32.totalorder %s20, 1
      %p59 = scmp.ne.s32.totalorder %s54, %s56
      %p60 = scmp.eq.s32.totalorder %s20, 0
      %p61 = por %p59, %p60
      %p62 = scmp.ne.s32.totalorder %s54, %s56
      %p63 = scmp.eq.s32.totalorder %s25, 1
      %p64 = por %p62, %p63
      %p65 = scmp.ne.s32.totalorder %s56, %s57
      %p66 = scmp.eq.s32.totalorder %s25, 0
      %p67 = por %p65, %p66
      %p68 = scmp.ne.s32.totalorder %s56, %s57
      %p69 = scmp.eq.s32.totalorder %s26, 1
      %p70 = por %p68, %p69
      %p72 = scmp.ne.s32.totalorder %s57, %s71
      %p73 = scmp.eq.s32.totalorder %s26, 0
      %p74 = por %p72, %p73
      %s76 = sadd.s32 %s75, 1
      %p79 = scmp.eq.s32.totalorder %s20, 1
      %p80 = scmp.ne.s32.totalorder %s75, %s77
      %p81 = scmp.eq.s32.totalorder %s20, 0
      %p82 = por %p80, %p81
      %p83 = scmp.ne.s32.totalorder %s75, %s77
      %p84 = scmp.eq.s32.totalorder %s25, 1
      %p85 = por %p83, %p84
      %p86 = scmp.ne.s32.totalorder %s77, %s78
      %p87 = scmp.eq.s32.totalorder %s25, 0
      %p88 = por %p86, %p87
      %p89 = scmp.ne.s32.totalorder %s77, %s78
      %p90 = scmp.eq.s32.totalorder %s26, 1
      %p91 = por %p89, %p90
      %p93 = scmp.ne.s32.totalorder %s78, %s92
      %p94 = scmp.eq.s32.totalorder %s26, 0
      %p95 = por %p93, %p94
      %s97 = sadd.s32 %s96, 1
      %p100 = scmp.eq.s32.totalorder %s20, 1
      %p101 = scmp.ne.s32.totalorder %s96, %s98
      %p102 = scmp.eq.s32.totalorder %s20, 0
      %p103 = por %p101, %p102
      %p104 = scmp.ne.s32.totalorder %s96, %s98
      %p105 = scmp.eq.s32.totalorder %s25, 1
      %p106 = por %p104, %p105
      %p107 = scmp.ne.s32.totalorder %s98, %s99
      %p108 = scmp.eq.s32.totalorder %s25, 0
      %p109 = por %p107, %p108
      %p110 = scmp.ne.s32.totalorder %s98, %s99
      %p111 = scmp.eq.s32.totalorder %s26, 1
      %p112 = por %p110, %p111
      %p114 = scmp.ne.s32.totalorder %s99, %s113
      %p115 = scmp.eq.s32.totalorder %s26, 0
      %p116 = por %p114, %p115
      %s118 = sadd.s32 %s117, 1
      %p121 = scmp.eq.s32.totalorder %s20, 1
      %p122 = scmp.ne.s32.totalorder %s117, %s119
      %p123 = scmp.eq.s32.totalorder %s20, 0
      %p124 = por %p122, %p123
      %p125 = scmp.ne.s32.totalorder %s117, %s119
      %p126 = scmp.eq.s32.totalorder %s25, 1
      %p127 = por %p125, %p126
      %p128 = scmp.ne.s32.totalorder %s119, %s120
      %p129 = scmp.eq.s32.totalorder %s25, 0
      %p130 = por %p128, %p129
      %p131 = scmp.ne.s32.totalorder %s119, %s120
      %p132 = scmp.eq.s32.totalorder %s26, 1
      %p133 = por %p131, %p132
      %p135 = scmp.ne.s32.totalorder %s120, %s134
      %p136 = scmp.eq.s32.totalorder %s26, 0
      %p137 = por %p135, %p136
      %s139 = sadd.s32 %s138, 1
      %p142 = scmp.eq.s32.totalorder %s20, 1
      %p143 = scmp.ne.s32.totalorder %s138, %s140
      %p144 = scmp.eq.s32.totalorder %s20, 0
      %p145 = por %p143, %p144
      %p146 = scmp.ne.s32.totalorder %s138, %s140
      %p147 = scmp.eq.s32.totalorder %s25, 1
      %p148 = por %p146, %p147
      %p149 = scmp.ne.s32.totalorder %s140, %s141
      %p150 = scmp.eq.s32.totalorder %s25, 0
      %p151 = por %p149, %p150
      %p152 = scmp.ne.s32.totalorder %s140, %s141
      %p153 = scmp.eq.s32.totalorder %s26, 1
      %p154 = por %p152, %p153
      %p156 = scmp.ne.s32.totalorder %s141, %s155
      %p157 = scmp.eq.s32.totalorder %s26, 0
      %p158 = por %p156, %p157
      %s160 = sadd.s32 %s159, 1
      %p163 = scmp.eq.s32.totalorder %s20, 1
      %p164 = scmp.ne.s32.totalorder %s159, %s161
      %p165 = scmp.eq.s32.totalorder %s20, 0
      %p166 = por %p164, %p165
      %p167 = scmp.ne.s32.totalorder %s159, %s161
      %p168 = scmp.eq.s32.totalorder %s25, 1
      %p169 = por %p167, %p168
      %p170 = scmp.ne.s32.totalorder %s161, %s162
      %p171 = scmp.eq.s32.totalorder %s25, 0
      %p172 = por %p170, %p171
      %p173 = scmp.ne.s32.totalorder %s161, %s162
      %p174 = scmp.eq.s32.totalorder %s26, 1
      %p175 = por %p173, %p174
      %p177 = scmp.ne.s32.totalorder %s162, %s176
      %p178 = scmp.eq.s32.totalorder %s26, 0
      %p179 = por %p177, %p178
      %s180 = ssub.s32 %s20, %s27
      %p181 = scmp.eq.s32.totalorder %s180, 0
      %s183 = sadd.s32 %s182, 1
      %s184 = scalar_select %p181, %s182, %s183
      %p187 = pneg %p181
      %p188 = scmp.eq.s32.totalorder %s20, 1
      %p189 = por %p187, %p188
      %p190 = scmp.ne.s32.totalorder %s182, %s185
      %p191 = scmp.eq.s32.totalorder %s20, 0
      %p192 = por %p190, %p191
      %p193 = scmp.ne.s32.totalorder %s182, %s185
      %p194 = scmp.eq.s32.totalorder %s25, 1
      %p195 = por %p193, %p194
      %p196 = scmp.ne.s32.totalorder %s185, %s186
      %p197 = scmp.eq.s32.totalorder %s25, 0
      %p198 = por %p196, %p197
      %p199 = scmp.ne.s32.totalorder %s185, %s186
      %p200 = scmp.eq.s32.totalorder %s26, 1
      %p201 = por %p199, %p200
      %p203 = scmp.ne.s32.totalorder %s186, %s202
      %p204 = scmp.eq.s32.totalorder %s26, 0
      %p205 = por %p203, %p204
      %p206 = scmp.le.s32.totalorder 1, %s20
      %p207 = scmp.lt.s32.totalorder %s20, 3
      %p208 = pnand %p206, %p207
      %p209 = pneg %p208
      // Predicated region
      $region9: #{tpu_custom_call.1} parent=5 // pred_check
        _
      $region10: #{tpu_custom_call.1} parent=5 // pred_check_branch
        %211 = sbr.rel (%p208) target = $region12
      $region11: #{tpu_custom_call.1} parent=5 // pred_region
        %s212 = ssub.s32 %s20, 1
        // Predicated region
        $region13: #{tpu_custom_call.1} parent=11 // pred_check
          %p213 = pneg %p67
        $region14: #{tpu_custom_call.1} parent=11 // pred_check_branch
          %215 = sbr.rel (%p213) target = $region16
        $region15: #{tpu_custom_call.1} parent=11 // pred_region
          %s217 = ssub.s32 1536, 1536
          %218 = vsyncadd [#allocation8], %s217
          %s219 = sshll.u32 [#allocation7], 4
          %s220 = int_to_ptr.vmem [resolvable:$true] %s219
          %225 = dma.hbm_to_vmem [thread:$0]  %s1, 1536, %s220, [#allocation8], 64, 64, 4
        $region16: #{tpu_custom_call.1} parent=11 // pred_fallthru
          _
        // Predicated region
        $region17: #{tpu_custom_call.1} parent=11 // pred_check
          %p226 = pneg %p88
        $region18: #{tpu_custom_call.1} parent=11 // pred_check_branch
          %228 = sbr.rel (%p226) target = $region20
        $region19: #{tpu_custom_call.1} parent=11 // pred_region
          _
        $region20: #{tpu_custom_call.1} parent=11 // pred_fallthru
          _
        // Predicated region
        $region21: #{tpu_custom_call.1} parent=11 // pred_check
          %p229 = pneg %p109
        $region22: #{tpu_custom_call.1} parent=11 // pred_check_branch
          %231 = sbr.rel (%p229) target = $region24
        $region23: #{tpu_custom_call.1} parent=11 // pred_region
          _
        $region24: #{tpu_custom_call.1} parent=11 // pred_fallthru
          _
        // Predicated region
        $region25: #{tpu_custom_call.1} parent=11 // pred_check
          %p232 = pneg %p130
        $region26: #{tpu_custom_call.1} parent=11 // pred_check_branch
          %234 = sbr.rel (%p232) target = $region28
        $region27: #{tpu_custom_call.1} parent=11 // pred_region
          %s236 = ssub.s32 3072, 3072
          %237 = vsyncadd [#allocation8], %s236
          %s238 = sshll.u32 [#allocation9], 4
          %s239 = int_to_ptr.vmem [resolvable:$true] %s238
          %244 = dma.hbm_to_vmem [thread:$0]  %s4, 3072, %s239, [#allocation8], 64, 64, 4
        $region28: #{tpu_custom_call.1} parent=11 // pred_fallthru
          _
        // Predicated region
        $region29: #{tpu_custom_call.1} parent=11 // pred_check
          %p245 = pneg %p151
        $region30: #{tpu_custom_call.1} parent=11 // pred_check_branch
          %247 = sbr.rel (%p245) target = $region32
        $region31: #{tpu_custom_call.1} parent=11 // pred_region
          _
        $region32: #{tpu_custom_call.1} parent=11 // pred_fallthru
          _
        // Predicated region
        $region33: #{tpu_custom_call.1} parent=11 // pred_check
          %p248 = pneg %p172
        $region34: #{tpu_custom_call.1} parent=11 // pred_check_branch
          %250 = sbr.rel (%p248) target = $region36
        $region35: #{tpu_custom_call.1} parent=11 // pred_region
          _
        $region36: #{tpu_custom_call.1} parent=11 // pred_fallthru
          _
      $region12: #{tpu_custom_call.1} parent=5 // pred_fallthru
        _
      %p251 = scmp.lt.s32.totalorder %s20, 2
      // Predicated region
      $region37: #{tpu_custom_call.1} parent=5 // pred_check
        %p252 = pneg %p251
      $region38: #{tpu_custom_call.1} parent=5 // pred_check_branch
        %254 = sbr.rel (%p252) target = $region40
      $region39: #{tpu_custom_call.1} parent=5 // pred_region
        // Predicated region
        $region41: #{tpu_custom_call.1} parent=39 // pred_check
          %p255 = pneg %p40
        $region42: #{tpu_custom_call.1} parent=39 // pred_check_branch
          %257 = sbr.rel (%p255) target = $region44
        $region43: #{tpu_custom_call.1} parent=39 // pred_region
          %s258 = sand.u32 %s30, 1
          %s259 = scalar_lea.sflag [#allocation5], %s258
          %s260 = sand.u32 %s30, 1
          %s261 = smul.addr %s260, 16
          %s262 = scalar_lea.vmem [#allocation4], %s261
          %s264 = ssub.s32 256, 256
          %265 = vsyncadd %s259, %s264
          %s266 = smul.addr %s20, 2
          %s267 = smul.addr %s266, 128
          %s268 = scalar_lea.hbm %s0, %s267
          %s269 = sshll.u32 %s262, 4
          %s270 = int_to_ptr.vmem [resolvable:$true] %s269
          %275 = dma.hbm_to_vmem [thread:$0]  %s268, 256, %s270, %s259, 128, 128, 8
        $region44: #{tpu_custom_call.1} parent=39 // pred_fallthru
          _
      $region40: #{tpu_custom_call.1} parent=5 // pred_fallthru
        _
      %p276 = scmp.le.s32.totalorder 1, %s20
      %p277 = scmp.lt.s32.totalorder %s20, 3
      %p278 = pnand %p276, %p277
      %p279 = pneg %p278
      // Predicated region
      $region45: #{tpu_custom_call.1} parent=5 // pred_check
        _
      $region46: #{tpu_custom_call.1} parent=5 // pred_check_branch
        %281 = sbr.rel (%p278) target = $region48
      $region47: #{tpu_custom_call.1} parent=5 // pred_region
        %s282 = ssub.s32 %s20, 1
        %s283 = sand.u32 %s33, 1
        %s284 = scalar_lea.sflag [#allocation5], %s283
        %s285 = sand.u32 %s33, 1
        %s286 = smul.addr %s285, 16
        %s287 = scalar_lea.vmem [#allocation4], %s286
        // Predicated region
        $region49: #{tpu_custom_call.1} parent=47 // pred_check
          %p288 = pneg %p46
        $region50: #{tpu_custom_call.1} parent=47 // pred_check_branch
          %290 = sbr.rel (%p288) target = $region52
        $region51: #{tpu_custom_call.1} parent=47 // pred_region
          %291 = dma.done %s284, 256
        $region52: #{tpu_custom_call.1} parent=47 // pred_fallthru
          _
        // Predicated region
        $region53: #{tpu_custom_call.1} parent=47 // pred_check
          %p292 = pneg %p67
        $region54: #{tpu_custom_call.1} parent=47 // pred_check_branch
          %294 = sbr.rel (%p292) target = $region56
        $region55: #{tpu_custom_call.1} parent=47 // pred_region
          %295 = dma.done [#allocation8], 1536
        $region56: #{tpu_custom_call.1} parent=47 // pred_fallthru
          _
        // Predicated region
        $region57: #{tpu_custom_call.1} parent=47 // pred_check
          %p296 = pneg %p130
        $region58: #{tpu_custom_call.1} parent=47 // pred_check_branch
          %298 = sbr.rel (%p296) target = $region60
        $region59: #{tpu_custom_call.1} parent=47 // pred_region
          %299 = dma.done [#allocation8], 3072
        $region60: #{tpu_custom_call.1} parent=47 // pred_fallthru
          _
        %s300 = sand.u32 %s33, 1
        %s301 = scalar_lea.sflag [#allocation5], %s300
        %s302 = sand.u32 %s33, 1
        %s303 = smul.addr %s302, 16
        %s304 = scalar_lea.vmem [#allocation4], %s303
        %p305 = pneg %p46
        %p306 = pneg %p43
        %p307 = pneg %p67
        %p308 = pneg %p64
        %p309 = pneg %p88
        %p310 = pneg %p85
        %p311 = pneg %p109
        %p312 = pneg %p106
        %p313 = pneg %p130
        %p314 = pneg %p127
        %p315 = pneg %p151
        %p316 = pneg %p148
        %p317 = pneg %p172
        %p318 = pneg %p169
        %p319 = pneg %p198
        %p320 = pneg %p195
        %s321 = sand.u32 %s185, 1
        %s322 = scalar_lea.sflag [#allocation6], %s321
        %s323 = sand.u32 %s185, 1
        %s324 = smul.addr %s323, 16
        %s325 = scalar_lea.vmem [#allocation10], %s324
        %vm327 = vcmask 516096
        %328 = vst.msk [vmem:[#allocation2] sm:$0x1] %vm327, 0.0
        %329 = vst.msk [vmem:[#allocation2 + $0x11] sm:$0x1] %vm327, 0.0
        %v330 = vld [vmem:[%s287] sm:$0xff]
        %v331 = vld [vmem:[%s287 + $0x8] sm:$0xff]
        %vm332 = vcmask 523264
        %333 = vst.msk [vmem:[#allocation2 + $0x1] sm:$0xff] %vm332, %v330
        %334 = vst.msk [vmem:[#allocation2 + $0x9] sm:$0xff] %vm332, %v331
        %v335 = vld [vmem:[#allocation2] sm:$0xff]
        %v336 = vld [vmem:[#allocation2 + $0x8] sm:$0xff]
        %v337 = vpack.c.bf16 %v336, %v335
        %v338 = vld [vmem:[#allocation7] sm:$0xf]
        %v339 = vld [vmem:[#allocation7 + $0x4] sm:$0xf]
        %v340 = vld [vmem:[#allocation7 + $0x8] sm:$0xf]
        %v341 = vld [vmem:[#allocation7 + $0xc] sm:$0xf]
        %v342 = vld [vmem:[#allocation7 + $0x10] sm:$0xf]
        %v343 = vld [vmem:[#allocation7 + $0x14] sm:$0xf]
        %v344 = vld [vmem:[#allocation7 + $0x18] sm:$0xf]
        %v345 = vld [vmem:[#allocation7 + $0x1c] sm:$0xf]
        %v346 = vld [vmem:[#allocation2 + $0x1] sm:$0xff]
        %v347 = vld [vmem:[#allocation2 + $0x9] sm:$0xff]
        %v348 = vpack.c.bf16 %v347, %v346
        %s349 = scalar_lea.vmem [#allocation7], 32
        %v350 = vld [vmem:[%s349] sm:$0xf]
        %v351 = vld [vmem:[%s349 + $0x4] sm:$0xf]
        %v352 = vld [vmem:[%s349 + $0x8] sm:$0xf]
        %v353 = vld [vmem:[%s349 + $0xc] sm:$0xf]
        %v354 = vld [vmem:[%s349 + $0x10] sm:$0xf]
        %v355 = vld [vmem:[%s349 + $0x14] sm:$0xf]
        %v356 = vld [vmem:[%s349 + $0x18] sm:$0xf]
        %v357 = vld [vmem:[%s349 + $0x1c] sm:$0xf]
        %v366 = vunpack.c.l.b16 %v350
        %v367 = vunpack.c.l.b16 %v351
        %v368 = vunpack.c.l.b16 %v352
        %v369 = vunpack.c.l.b16 %v353
        %v370 = vunpack.c.l.b16 %v354
        %v371 = vunpack.c.l.b16 %v355
        %v372 = vunpack.c.l.b16 %v356
        %v373 = vunpack.c.l.b16 %v357
        %v374 = vpack.c.b16 %v367, %v366
        %v375 = vpack.c.b16 %v369, %v368
        %v376 = vpack.c.b16 %v371, %v370
        %v377 = vpack.c.b16 %v373, %v372
        %v383 = vsel %vm332, %v348, 0
        %385 = vmatprep.subr.bf16.mxu0 0
        %386 = vmatpush1.bf16.msra.mxu0 0
        %387 = vmatprep.subr.bf16.mxu0 0
        %388 = vmatpush1.bf16.msra.mxu0 0
        %389 = vmatprep.subr.bf16.mxu0 0
        %390 = vmatpush1.bf16.msra.mxu0 0
        %391 = vmatprep.subr.bf16.mxu0 0
        %392 = vmatpush1.bf16.msra.mxu0 0
        %393 = vmatprep.subr.bf16.mxu0 0
        %394 = vmatpush1.bf16.msra.mxu0 %v377
        %395 = vmatprep.subr.bf16.mxu0 0
        %396 = vmatpush1.bf16.msra.mxu0 %v376
        %397 = vmatprep.subr.bf16.mxu0 0
        %398 = vmatpush1.bf16.msra.mxu0 %v375
        %399 = vmatprep.subr.bf16.mxu0 0
        %400 = vmatpush1.bf16.msra.mxu0 %v374
        %401 = vmatprep.subr.bf16.mxu0 0
        %402 = vmatpush2.bf16.msra.mxu0 0
        %403 = vmatprep.subr.bf16.mxu0 0
        %404 = vmatpush2.bf16.msra.mxu0 0
        %405 = vmatprep.subr.bf16.mxu0 0
        %406 = vmatpush2.bf16.msra.mxu0 0
        %407 = vmatprep.subr.bf16.mxu0 0
        %408 = vmatpush2.bf16.msra.mxu0 0
        %409 = vmatprep.subr.bf16.mxu0 0
        %410 = vmatpush2.bf16.msra.mxu0 0
        %411 = vmatprep.subr.bf16.mxu0 0
        %412 = vmatpush2.bf16.msra.mxu0 0
        %413 = vmatprep.subr.bf16.mxu0 0
        %414 = vmatpush2.bf16.msra.mxu0 0
        %415 = vmatprep.subr.bf16.mxu0 0
        %416 = vmatpush2.bf16.msra.mxu0 0
        %417 = vmatprep.mubr.bf16.mxu0 0
        %418 = vmatmul.mubr.bf16.gmra.mxu0 %v383
        %v419 = vpop.f32.mrf.mxu0
        %v420 = vadd.f32 0.0, %v419
        %v421 = vpop.f32.mrf.mxu0
        %v422 = vpop.f32.mrf.mxu0
        %v423 = vadd.f32 0.0, %v422
        %v424 = vpop.f32.mrf.mxu0
        %425 = vdwg.mxu0
        %v434 = vunpack.c.l.b16 %v338
        %v435 = vunpack.c.l.b16 %v339
        %v436 = vunpack.c.l.b16 %v340
        %v437 = vunpack.c.l.b16 %v341
        %v438 = vunpack.c.l.b16 %v342
        %v439 = vunpack.c.l.b16 %v343
        %v440 = vunpack.c.l.b16 %v344
        %v441 = vunpack.c.l.b16 %v345
        %v442 = vpack.c.b16 %v435, %v434
        %v443 = vpack.c.b16 %v437, %v436
        %v444 = vpack.c.b16 %v439, %v438
        %v445 = vpack.c.b16 %v441, %v440
        %v451 = vsel %vm332, %v337, 0
        %453 = vmatprep.subr.bf16.mxu0 0
        %454 = vmatpush1.bf16.msra.mxu0 0
        %455 = vmatprep.subr.bf16.mxu0 0
        %456 = vmatpush1.bf16.msra.mxu0 0
        %457 = vmatprep.subr.bf16.mxu0 0
        %458 = vmatpush1.bf16.msra.mxu0 0
        %459 = vmatprep.subr.bf16.mxu0 0
        %460 = vmatpush1.bf16.msra.mxu0 0
        %461 = vmatprep.subr.bf16.mxu0 0
        %462 = vmatpush1.bf16.msra.mxu0 %v445
        %463 = vmatprep.subr.bf16.mxu0 0
        %464 = vmatpush1.bf16.msra.mxu0 %v444
        %465 = vmatprep.subr.bf16.mxu0 0
        %466 = vmatpush1.bf16.msra.mxu0 %v443
        %467 = vmatprep.subr.bf16.mxu0 0
        %468 = vmatpush1.bf16.msra.mxu0 %v442
        %469 = vmatprep.subr.bf16.mxu0 0
        %470 = vmatpush2.bf16.msra.mxu0 0
        %471 = vmatprep.subr.bf16.mxu0 0
        %472 = vmatpush2.bf16.msra.mxu0 0
        %473 = vmatprep.subr.bf16.mxu0 0
        %474 = vmatpush2.bf16.msra.mxu0 0
        %475 = vmatprep.subr.bf16.mxu0 0
        %476 = vmatpush2.bf16.msra.mxu0 0
        %477 = vmatprep.subr.bf16.mxu0 0
        %478 = vmatpush2.bf16.msra.mxu0 0
        %479 = vmatprep.subr.bf16.mxu0 0
        %480 = vmatpush2.bf16.msra.mxu0 0
        %481 = vmatprep.subr.bf16.mxu0 0
        %482 = vmatpush2.bf16.msra.mxu0 0
        %483 = vmatprep.subr.bf16.mxu0 0
        %484 = vmatpush2.bf16.msra.mxu0 0
        %485 = vmatprep.mubr.bf16.mxu0 0
        %486 = vmatmul.mubr.bf16.gmra.mxu0 %v451
        %v487 = vpop.f32.mrf.mxu0
        %v488 = vadd.f32 %v420, %v487
        %v489 = vpop.f32.mrf.mxu0
        %v490 = vpop.f32.mrf.mxu0
        %v491 = vadd.f32 %v423, %v490
        %v492 = vpop.f32.mrf.mxu0
        %493 = vdwg.mxu0
        %v494 = vld [vmem:[#allocation2 + $0x2] sm:$0xff]
        %v495 = vld [vmem:[#allocation2 + $0xa] sm:$0xff]
        %v496 = vpack.c.bf16 %v495, %v494
        %s497 = scalar_lea.vmem [#allocation7], 64
        %v498 = vld [vmem:[%s497] sm:$0xf]
        %v499 = vld [vmem:[%s497 + $0x4] sm:$0xf]
        %v500 = vld [vmem:[%s497 + $0x8] sm:$0xf]
        %v501 = vld [vmem:[%s497 + $0xc] sm:$0xf]
        %v502 = vld [vmem:[%s497 + $0x10] sm:$0xf]
        %v503 = vld [vmem:[%s497 + $0x14] sm:$0xf]
        %v504 = vld [vmem:[%s497 + $0x18] sm:$0xf]
        %v505 = vld [vmem:[%s497 + $0x1c] sm:$0xf]
        %v514 = vunpack.c.l.b16 %v498
        %v515 = vunpack.c.l.b16 %v499
        %v516 = vunpack.c.l.b16 %v500
        %v517 = vunpack.c.l.b16 %v501
        %v518 = vunpack.c.l.b16 %v502
        %v519 = vunpack.c.l.b16 %v503
        %v520 = vunpack.c.l.b16 %v504
        %v521 = vunpack.c.l.b16 %v505
        %v522 = vpack.c.b16 %v515, %v514
        %v523 = vpack.c.b16 %v517, %v516
        %v524 = vpack.c.b16 %v519, %v518
        %v525 = vpack.c.b16 %v521, %v520
        %v531 = vsel %vm332, %v496, 0
        %533 = vmatprep.subr.bf16.mxu0 0
        %534 = vmatpush1.bf16.msra.mxu0 0
        %535 = vmatprep.subr.bf16.mxu0 0
        %536 = vmatpush1.bf16.msra.mxu0 0
        %537 = vmatprep.subr.bf16.mxu0 0
        %538 = vmatpush1.bf16.msra.mxu0 0
        %539 = vmatprep.subr.bf16.mxu0 0
        %540 = vmatpush1.bf16.msra.mxu0 0
        %541 = vmatprep.subr.bf16.mxu0 0
        %542 = vmatpush1.bf16.msra.mxu0 %v525
        %543 = vmatprep.subr.bf16.mxu0 0
        %544 = vmatpush1.bf16.msra.mxu0 %v524
        %545 = vmatprep.subr.bf16.mxu0 0
        %546 = vmatpush1.bf16.msra.mxu0 %v523
        %547 = vmatprep.subr.bf16.mxu0 0
        %548 = vmatpush1.bf16.msra.mxu0 %v522
        %549 = vmatprep.subr.bf16.mxu0 0
        %550 = vmatpush2.bf16.msra.mxu0 0
        %551 = vmatprep.subr.bf16.mxu0 0
        %552 = vmatpush2.bf16.msra.mxu0 0
        %553 = vmatprep.subr.bf16.mxu0 0
        %554 = vmatpush2.bf16.msra.mxu0 0
        %555 = vmatprep.subr.bf16.mxu0 0
        %556 = vmatpush2.bf16.msra.mxu0 0
        %557 = vmatprep.subr.bf16.mxu0 0
        %558 = vmatpush2.bf16.msra.mxu0 0
        %559 = vmatprep.subr.bf16.mxu0 0
        %560 = vmatpush2.bf16.msra.mxu0 0
        %561 = vmatprep.subr.bf16.mxu0 0
        %562 = vmatpush2.bf16.msra.mxu0 0
        %563 = vmatprep.subr.bf16.mxu0 0
        %564 = vmatpush2.bf16.msra.mxu0 0
        %565 = vmatprep.mubr.bf16.mxu0 0
        %566 = vmatmul.mubr.bf16.gmra.mxu0 %v531
        %v567 = vpop.f32.mrf.mxu0
        %v568 = vadd.f32 0.0, %v567
        %v569 = vpop.f32.mrf.mxu0
        %v570 = vpop.f32.mrf.mxu0
        %v571 = vadd.f32 0.0, %v570
        %v572 = vpop.f32.mrf.mxu0
        %573 = vdwg.mxu0
        %v574 = vadd.f32 %v488, %v568
        %v575 = vadd.f32 %v491, %v571
        %v576 = vld [vmem:[%s2] sm:$0x1]
        %v577 = vld [vmem:[%s3] sm:$0x1]
        %v578 = vadd.f32 %v574, %v575
        %579 = vadd.xlane.f32.xlu0 %v578
        %v580 = vpop.xlane.xlu0 %579
        %v581 = vrot.slane %v580, 4
        %v582 = vadd.f32 %v580, %v581
        %v583 = vrot.slane %v582, 2
        %v584 = vadd.f32 %v582, %v583
        %v585 = vrot.slane %v584, 1
        %v586 = vadd.f32 %v584, %v585
        %s587 = vtos %v586
        %v588 = vrcp.pop 2048.0
        %s589 = vtos %v588
        %s590 = smul.f32 %s587, %s589
        %v591 = vstv %s590
        %v592 = vsub.f32 %v574, %v591
        %v593 = vsub.f32 %v575, %v591
        %v594 = vmul.f32 %v592, %v592
        %v595 = vmul.f32 %v593, %v593
        %v596 = vadd.f32 %v594, %v595
        %597 = vadd.xlane.f32.xlu0 %v596
        %v598 = vpop.xlane.xlu0 %597
        %v599 = vrot.slane %v598, 4
        %v600 = vadd.f32 %v598, %v599
        %v601 = vrot.slane %v600, 2
        %v602 = vadd.f32 %v600, %v601
        %v603 = vrot.slane %v602, 1
        %v604 = vadd.f32 %v602, %v603
        %s605 = vtos %v604
        %v606 = vrcp.pop 2048.0
        %s607 = vtos %v606
        %s608 = smul.f32 %s605, %s607
        %s609 = sadd.f32 %s608, 1e-05
        %v610 = vstv %s609
        %v611 = vrsqrt.pop %v610
        %s612 = vtos %v611
        %v613 = vstv %s612
        %v614 = vmul.f32 %v613, %v576
        %v616 = vlaneseq
        %v617 = vshrl.u32 %v616, 7
        %v618 = vsub.s32 0, %v617
        %v619 = vrot.slane %v614, %v618
        %v621 = vmul.f32 %v592, %v619
        %v622 = vmul.f32 %v593, %v619
        %v624 = vlaneseq
        %v625 = vshrl.u32 %v624, 7
        %v626 = vsub.s32 0, %v625
        %v627 = vrot.slane %v577, %v626
        %v629 = vadd.f32 %v621, %v627
        %v630 = vadd.f32 %v622, %v627
        %v631 = vmul.f32 %v629, 0.5
        %v632 = vmul.f32 %v630, 0.5
        %v633 = vmul.f32 %v629, 0.70710677
        %v634 = vmul.f32 %v630, 0.70710677
        %v635 = verf.f32.pop %v633
        %v636 = verf.f32.pop %v634
        %v637 = vadd.f32 %v635, 1.0
        %v638 = vadd.f32 %v636, 1.0
        %v639 = vmul.f32 %v631, %v637
        %v640 = vmul.f32 %v632, %v638
        %641 = vst [vmem:[#allocation3] sm:$0x1] 0.0
        %642 = vst [vmem:[#allocation3 + $0x11] sm:$0x1] 0.0
        %643 = vst [vmem:[#allocation3 + $0x1] sm:$0xff] %v639
        %644 = vst [vmem:[#allocation3 + $0x9] sm:$0xff] %v640
        %v645 = vld [vmem:[#allocation3] sm:$0xff]
        %v646 = vld [vmem:[#allocation3 + $0x8] sm:$0xff]
        %v647 = vpack.c.bf16 %v646, %v645
        %v648 = vld [vmem:[#allocation9] sm:$0xf]
        %v649 = vld [vmem:[#allocation9 + $0x4] sm:$0xf]
        %v650 = vld [vmem:[#allocation9 + $0x8] sm:$0xf]
        %v651 = vld [vmem:[#allocation9 + $0xc] sm:$0xf]
        %v652 = vld [vmem:[#allocation9 + $0x10] sm:$0xf]
        %v653 = vld [vmem:[#allocation9 + $0x14] sm:$0xf]
        %v654 = vld [vmem:[#allocation9 + $0x18] sm:$0xf]
        %v655 = vld [vmem:[#allocation9 + $0x1c] sm:$0xf]
        %v656 = vld [vmem:[#allocation9 + $0x20] sm:$0xf]
        %v657 = vld [vmem:[#allocation9 + $0x24] sm:$0xf]
        %v658 = vld [vmem:[#allocation9 + $0x28] sm:$0xf]
        %v659 = vld [vmem:[#allocation9 + $0x2c] sm:$0xf]
        %v660 = vld [vmem:[#allocation9 + $0x30] sm:$0xf]
        %v661 = vld [vmem:[#allocation9 + $0x34] sm:$0xf]
        %v662 = vld [vmem:[#allocation9 + $0x38] sm:$0xf]
        %v663 = vld [vmem:[#allocation9 + $0x3c] sm:$0xf]
        %v664 = vld [vmem:[#allocation3 + $0x1] sm:$0xff]
        %v665 = vld [vmem:[#allocation3 + $0x9] sm:$0xff]
        %v666 = vpack.c.bf16 %v665, %v664
        %s667 = scalar_lea.vmem [#allocation9], 64
        %v668 = vld [vmem:[%s667] sm:$0xf]
        %v669 = vld [vmem:[%s667 + $0x4] sm:$0xf]
        %v670 = vld [vmem:[%s667 + $0x8] sm:$0xf]
        %v671 = vld [vmem:[%s667 + $0xc] sm:$0xf]
        %v672 = vld [vmem:[%s667 + $0x10] sm:$0xf]
        %v673 = vld [vmem:[%s667 + $0x14] sm:$0xf]
        %v674 = vld [vmem:[%s667 + $0x18] sm:$0xf]
        %v675 = vld [vmem:[%s667 + $0x1c] sm:$0xf]
        %v676 = vld [vmem:[%s667 + $0x20] sm:$0xf]
        %v677 = vld [vmem:[%s667 + $0x24] sm:$0xf]
        %v678 = vld [vmem:[%s667 + $0x28] sm:$0xf]
        %v679 = vld [vmem:[%s667 + $0x2c] sm:$0xf]
        %v680 = vld [vmem:[%s667 + $0x30] sm:$0xf]
        %v681 = vld [vmem:[%s667 + $0x34] sm:$0xf]
        %v682 = vld [vmem:[%s667 + $0x38] sm:$0xf]
        %v683 = vld [vmem:[%s667 + $0x3c] sm:$0xf]
        %v700 = vunpack.c.l.b16 %v668
        %v701 = vunpack.c.l.b16 %v669
        %v702 = vunpack.c.l.b16 %v670
        %v703 = vunpack.c.l.b16 %v671
        %v704 = vunpack.c.l.b16 %v672
        %v705 = vunpack.c.l.b16 %v673
        %v706 = vunpack.c.l.b16 %v674
        %v707 = vunpack.c.l.b16 %v675
        %v708 = vunpack.c.l.b16 %v676
        %v709 = vunpack.c.l.b16 %v677
        %v710 = vunpack.c.l.b16 %v678
        %v711 = vunpack.c.l.b16 %v679
        %v712 = vunpack.c.l.b16 %v680
        %v713 = vunpack.c.l.b16 %v681
        %v714 = vunpack.c.l.b16 %v682
        %v715 = vunpack.c.l.b16 %v683
        %v716 = vpack.c.b16 %v701, %v700
        %v717 = vpack.c.b16 %v703, %v702
        %v718 = vpack.c.b16 %v705, %v704
        %v719 = vpack.c.b16 %v707, %v706
        %v720 = vpack.c.b16 %v709, %v708
        %v721 = vpack.c.b16 %v711, %v710
        %v722 = vpack.c.b16 %v713, %v712
        %v723 = vpack.c.b16 %v715, %v714
        %732 = vmatprep.subr.bf16.mxu0 0
        %733 = vmatpush1.bf16.msra.mxu0 %v723
        %734 = vmatprep.subr.bf16.mxu0 0
        %735 = vmatpush1.bf16.msra.mxu0 %v722
        %736 = vmatprep.subr.bf16.mxu0 0
        %737 = vmatpush1.bf16.msra.mxu0 %v721
        %738 = vmatprep.subr.bf16.mxu0 0
        %739 = vmatpush1.bf16.msra.mxu0 %v720
        %740 = vmatprep.subr.bf16.mxu0 0
        %741 = vmatpush1.bf16.msra.mxu0 %v719
        %742 = vmatprep.subr.bf16.mxu0 0
        %743 = vmatpush1.bf16.msra.mxu0 %v718
        %744 = vmatprep.subr.bf16.mxu0 0
        %745 = vmatpush1.bf16.msra.mxu0 %v717
        %746 = vmatprep.subr.bf16.mxu0 0
        %747 = vmatpush1.bf16.msra.mxu0 %v716
        %748 = vmatprep.subr.bf16.mxu0 0
        %749 = vmatpush2.bf16.msra.mxu0 0
        %750 = vmatprep.subr.bf16.mxu0 0
        %751 = vmatpush2.bf16.msra.mxu0 0
        %752 = vmatprep.subr.bf16.mxu0 0
        %753 = vmatpush2.bf16.msra.mxu0 0
        %754 = vmatprep.subr.bf16.mxu0 0
        %755 = vmatpush2.bf16.msra.mxu0 0
        %756 = vmatprep.subr.bf16.mxu0 0
        %757 = vmatpush2.bf16.msra.mxu0 0
        %758 = vmatprep.subr.bf16.mxu0 0
        %759 = vmatpush2.bf16.msra.mxu0 0
        %760 = vmatprep.subr.bf16.mxu0 0
        %761 = vmatpush2.bf16.msra.mxu0 0
        %762 = vmatprep.subr.bf16.mxu0 0
        %763 = vmatpush2.bf16.msra.mxu0 0
        %764 = vmatprep.mubr.bf16.mxu0 0
        %765 = vmatmul.mubr.bf16.gmra.mxu0 %v666
        %v766 = vpop.f32.mrf.mxu0
        %v767 = vadd.f32 0.0, %v766
        %v768 = vpop.f32.mrf.mxu0
        %v769 = vpop.f32.mrf.mxu0
        %v770 = vadd.f32 0.0, %v769
        %v771 = vpop.f32.mrf.mxu0
        %772 = vdwg.mxu0
        %v789 = vunpack.c.l.b16 %v648
        %v790 = vunpack.c.l.b16 %v649
        %v791 = vunpack.c.l.b16 %v650
        %v792 = vunpack.c.l.b16 %v651
        %v793 = vunpack.c.l.b16 %v652
        %v794 = vunpack.c.l.b16 %v653
        %v795 = vunpack.c.l.b16 %v654
        %v796 = vunpack.c.l.b16 %v655
        %v797 = vunpack.c.l.b16 %v656
        %v798 = vunpack.c.l.b16 %v657
        %v799 = vunpack.c.l.b16 %v658
        %v800 = vunpack.c.l.b16 %v659
        %v801 = vunpack.c.l.b16 %v660
        %v802 = vunpack.c.l.b16 %v661
        %v803 = vunpack.c.l.b16 %v662
        %v804 = vunpack.c.l.b16 %v663
        %v805 = vpack.c.b16 %v790, %v789
        %v806 = vpack.c.b16 %v792, %v791
        %v807 = vpack.c.b16 %v794, %v793
        %v808 = vpack.c.b16 %v796, %v795
        %v809 = vpack.c.b16 %v798, %v797
        %v810 = vpack.c.b16 %v800, %v799
        %v811 = vpack.c.b16 %v802, %v801
        %v812 = vpack.c.b16 %v804, %v803
        %821 = vmatprep.subr.bf16.mxu0 0
        %822 = vmatpush1.bf16.msra.mxu0 %v812
        %823 = vmatprep.subr.bf16.mxu0 0
        %824 = vmatpush1.bf16.msra.mxu0 %v811
        %825 = vmatprep.subr.bf16.mxu0 0
        %826 = vmatpush1.bf16.msra.mxu0 %v810
        %827 = vmatprep.subr.bf16.mxu0 0
        %828 = vmatpush1.bf16.msra.mxu0 %v809
        %829 = vmatprep.subr.bf16.mxu0 0
        %830 = vmatpush1.bf16.msra.mxu0 %v808
        %831 = vmatprep.subr.bf16.mxu0 0
        %832 = vmatpush1.bf16.msra.mxu0 %v807
        %833 = vmatprep.subr.bf16.mxu0 0
        %834 = vmatpush1.bf16.msra.mxu0 %v806
        %835 = vmatprep.subr.bf16.mxu0 0
        %836 = vmatpush1.bf16.msra.mxu0 %v805
        %837 = vmatprep.subr.bf16.mxu0 0
        %838 = vmatpush2.bf16.msra.mxu0 0
        %839 = vmatprep.subr.bf16.mxu0 0
        %840 = vmatpush2.bf16.msra.mxu0 0
        %841 = vmatprep.subr.bf16.mxu0 0
        %842 = vmatpush2.bf16.msra.mxu0 0
        %843 = vmatprep.subr.bf16.mxu0 0
        %844 = vmatpush2.bf16.msra.mxu0 0
        %845 = vmatprep.subr.bf16.mxu0 0
        %846 = vmatpush2.bf16.msra.mxu0 0
        %847 = vmatprep.subr.bf16.mxu0 0
        %848 = vmatpush2.bf16.msra.mxu0 0
        %849 = vmatprep.subr.bf16.mxu0 0
        %850 = vmatpush2.bf16.msra.mxu0 0
        %851 = vmatprep.subr.bf16.mxu0 0
        %852 = vmatpush2.bf16.msra.mxu0 0
        %853 = vmatprep.mubr.bf16.mxu0 0
        %854 = vmatmul.mubr.bf16.gmra.mxu0 %v647
        %v855 = vpop.f32.mrf.mxu0
        %v856 = vadd.f32 %v767, %v855
        %v857 = vpop.f32.mrf.mxu0
        %v858 = vpop.f32.mrf.mxu0
        %v859 = vadd.f32 %v770, %v858
        %v860 = vpop.f32.mrf.mxu0
        %861 = vdwg.mxu0
        %v862 = vld [vmem:[#allocation3 + $0x2] sm:$0xff]
        %v863 = vld [vmem:[#allocation3 + $0xa] sm:$0xff]
        %v864 = vpack.c.bf16 %v863, %v862
        %s865 = scalar_lea.vmem [#allocation9], 128
        %v866 = vld [vmem:[%s865] sm:$0xf]
        %v867 = vld [vmem:[%s865 + $0x4] sm:$0xf]
        %v868 = vld [vmem:[%s865 + $0x8] sm:$0xf]
        %v869 = vld [vmem:[%s865 + $0xc] sm:$0xf]
        %v870 = vld [vmem:[%s865 + $0x10] sm:$0xf]
        %v871 = vld [vmem:[%s865 + $0x14] sm:$0xf]
        %v872 = vld [vmem:[%s865 + $0x18] sm:$0xf]
        %v873 = vld [vmem:[%s865 + $0x1c] sm:$0xf]
        %v874 = vld [vmem:[%s865 + $0x20] sm:$0xf]
        %v875 = vld [vmem:[%s865 + $0x24] sm:$0xf]
        %v876 = vld [vmem:[%s865 + $0x28] sm:$0xf]
        %v877 = vld [vmem:[%s865 + $0x2c] sm:$0xf]
        %v878 = vld [vmem:[%s865 + $0x30] sm:$0xf]
        %v879 = vld [vmem:[%s865 + $0x34] sm:$0xf]
        %v880 = vld [vmem:[%s865 + $0x38] sm:$0xf]
        %v881 = vld [vmem:[%s865 + $0x3c] sm:$0xf]
        %v898 = vunpack.c.l.b16 %v866
        %v899 = vunpack.c.l.b16 %v867
        %v900 = vunpack.c.l.b16 %v868
        %v901 = vunpack.c.l.b16 %v869
        %v902 = vunpack.c.l.b16 %v870
        %v903 = vunpack.c.l.b16 %v871
        %v904 = vunpack.c.l.b16 %v872
        %v905 = vunpack.c.l.b16 %v873
        %v906 = vunpack.c.l.b16 %v874
        %v907 = vunpack.c.l.b16 %v875
        %v908 = vunpack.c.l.b16 %v876
        %v909 = vunpack.c.l.b16 %v877
        %v910 = vunpack.c.l.b16 %v878
        %v911 = vunpack.c.l.b16 %v879
        %v912 = vunpack.c.l.b16 %v880
        %v913 = vunpack.c.l.b16 %v881
        %v914 = vpack.c.b16 %v899, %v898
        %v915 = vpack.c.b16 %v901, %v900
        %v916 = vpack.c.b16 %v903, %v902
        %v917 = vpack.c.b16 %v905, %v904
        %v918 = vpack.c.b16 %v907, %v906
        %v919 = vpack.c.b16 %v909, %v908
        %v920 = vpack.c.b16 %v911, %v910
        %v921 = vpack.c.b16 %v913, %v912
        %930 = vmatprep.subr.bf16.mxu0 0
        %931 = vmatpush1.bf16.msra.mxu0 %v921
        %932 = vmatprep.subr.bf16.mxu0 0
        %933 = vmatpush1.bf16.msra.mxu0 %v920
        %934 = vmatprep.subr.bf16.mxu0 0
        %935 = vmatpush1.bf16.msra.mxu0 %v919
        %936 = vmatprep.subr.bf16.mxu0 0
        %937 = vmatpush1.bf16.msra.mxu0 %v918
        %938 = vmatprep.subr.bf16.mxu0 0
        %939 = vmatpush1.bf16.msra.mxu0 %v917
        %940 = vmatprep.subr.bf16.mxu0 0
        %941 = vmatpush1.bf16.msra.mxu0 %v916
        %942 = vmatprep.subr.bf16.mxu0 0
        %943 = vmatpush1.bf16.msra.mxu0 %v915
        %944 = vmatprep.subr.bf16.mxu0 0
        %945 = vmatpush1.bf16.msra.mxu0 %v914
        %946 = vmatprep.subr.bf16.mxu0 0
        %947 = vmatpush2.bf16.msra.mxu0 0
        %948 = vmatprep.subr.bf16.mxu0 0
        %949 = vmatpush2.bf16.msra.mxu0 0
        %950 = vmatprep.subr.bf16.mxu0 0
        %951 = vmatpush2.bf16.msra.mxu0 0
        %952 = vmatprep.subr.bf16.mxu0 0
        %953 = vmatpush2.bf16.msra.mxu0 0
        %954 = vmatprep.subr.bf16.mxu0 0
        %955 = vmatpush2.bf16.msra.mxu0 0
        %956 = vmatprep.subr.bf16.mxu0 0
        %957 = vmatpush2.bf16.msra.mxu0 0
        %958 = vmatprep.subr.bf16.mxu0 0
        %959 = vmatpush2.bf16.msra.mxu0 0
        %960 = vmatprep.subr.bf16.mxu0 0
        %961 = vmatpush2.bf16.msra.mxu0 0
        %962 = vmatprep.mubr.bf16.mxu0 0
        %963 = vmatmul.mubr.bf16.gmra.mxu0 %v864
        %v964 = vpop.f32.mrf.mxu0
        %v965 = vadd.f32 0.0, %v964
        %v966 = vpop.f32.mrf.mxu0
        %v967 = vpop.f32.mrf.mxu0
        %v968 = vadd.f32 0.0, %v967
        %v969 = vpop.f32.mrf.mxu0
        %970 = vdwg.mxu0
        %v971 = vadd.f32 %v856, %v965
        %v972 = vadd.f32 %v859, %v968
        %v973 = vld [vmem:[%s5] sm:$0x1]
        %v974 = vld [vmem:[%s6] sm:$0x1]
        %v975 = vadd.f32 %v971, %v972
        %976 = vadd.xlane.f32.xlu0 %v975
        %v977 = vpop.xlane.xlu0 %976
        %v978 = vrot.slane %v977, 4
        %v979 = vadd.f32 %v977, %v978
        %v980 = vrot.slane %v979, 2
        %v981 = vadd.f32 %v979, %v980
        %v982 = vrot.slane %v981, 1
        %v983 = vadd.f32 %v981, %v982
        %s984 = vtos %v983
        %v985 = vrcp.pop 2048.0
        %s986 = vtos %v985
        %s987 = smul.f32 %s984, %s986
        %v988 = vstv %s987
        %v989 = vsub.f32 %v971, %v988
        %v990 = vsub.f32 %v972, %v988
        %v991 = vmul.f32 %v989, %v989
        %v992 = vmul.f32 %v990, %v990
        %v993 = vadd.f32 %v991, %v992
        %994 = vadd.xlane.f32.xlu0 %v993
        %v995 = vpop.xlane.xlu0 %994
        %v996 = vrot.slane %v995, 4
        %v997 = vadd.f32 %v995, %v996
        %v998 = vrot.slane %v997, 2
        %v999 = vadd.f32 %v997, %v998
        %v1000 = vrot.slane %v999, 1
        %v1001 = vadd.f32 %v999, %v1000
        %s1002 = vtos %v1001
        %v1003 = vrcp.pop 2048.0
        %s1004 = vtos %v1003
        %s1005 = smul.f32 %s1002, %s1004
        %s1006 = sadd.f32 %s1005, 1e-05
        %v1007 = vstv %s1006
        %v1008 = vrsqrt.pop %v1007
        %s1009 = vtos %v1008
        %v1010 = vstv %s1009
        %v1011 = vmul.f32 %v1010, %v973
        %v1013 = vlaneseq
        %v1014 = vshrl.u32 %v1013, 7
        %v1015 = vsub.s32 0, %v1014
        %v1016 = vrot.slane %v1011, %v1015
        %v1018 = vmul.f32 %v989, %v1016
        %v1019 = vmul.f32 %v990, %v1016
        %v1021 = vlaneseq
        %v1022 = vshrl.u32 %v1021, 7
        %v1023 = vsub.s32 0, %v1022
        %v1024 = vrot.slane %v974, %v1023
        %v1026 = vadd.f32 %v1018, %v1024
        %v1027 = vadd.f32 %v1019, %v1024
        %1028 = vst [vmem:[%s325] sm:$0xff] %v1026
        %1029 = vst [vmem:[%s325 + $0x8] sm:$0xff] %v1027
        %s1030 = sand.u32 %s185, 1
        %s1031 = scalar_lea.sflag [#allocation6], %s1030
        %s1032 = sand.u32 %s185, 1
        %s1033 = smul.addr %s1032, 16
        %s1034 = scalar_lea.vmem [#allocation10], %s1033
        // Predicated region
        $region61: #{tpu_custom_call.1} parent=47 // pred_check
          %p1035 = pneg %p195
        $region62: #{tpu_custom_call.1} parent=47 // pred_check_branch
          %1037 = sbr.rel (%p1035) target = $region64
        $region63: #{tpu_custom_call.1} parent=47 // pred_region
          %s1039 = ssub.s32 256, 256
          %1040 = vsyncadd %s1031, %s1039
          %s1041 = smul.addr %s25, 2
          %s1042 = smul.addr %s1041, 128
          %s1043 = scalar_lea.hbm %s7, %s1042
          %s1044 = sshll.u32 %s1034, 4
          %s1045 = int_to_ptr.vmem [resolvable:$true] %s1044
          %1050 = dma.vmem_to_hbm [thread:$0]  %s1045, 256, %s1043, %s1031, 128, 128, 8
        $region64: #{tpu_custom_call.1} parent=47 // pred_fallthru
          _
      $region48: #{tpu_custom_call.1} parent=5 // pred_fallthru
        _
      %p1051 = scmp.le.s32.totalorder 2, %s20
      // Predicated region
      $region65: #{tpu_custom_call.1} parent=5 // pred_check
        %p1052 = pneg %p1051
      $region66: #{tpu_custom_call.1} parent=5 // pred_check_branch
        %1054 = sbr.rel (%p1052) target = $region68
      $region67: #{tpu_custom_call.1} parent=5 // pred_region
        %s1055 = ssub.s32 %s20, 2
        // Predicated region
        $region69: #{tpu_custom_call.1} parent=67 // pred_check
          %p1056 = pneg %p201
        $region70: #{tpu_custom_call.1} parent=67 // pred_check_branch
          %1058 = sbr.rel (%p1056) target = $region72
        $region71: #{tpu_custom_call.1} parent=67 // pred_region
          %s1059 = sand.u32 %s186, 1
          %s1060 = scalar_lea.sflag [#allocation6], %s1059
          %s1061 = sand.u32 %s186, 1
          %s1062 = smul.addr %s1061, 16
          %s1063 = scalar_lea.vmem [#allocation10], %s1062
          %1064 = dma.done %s1060, 256
        $region72: #{tpu_custom_call.1} parent=67 // pred_fallthru
          _
      $region68: #{tpu_custom_call.1} parent=5 // pred_fallthru
        _
    $region6: #{tpu_custom_call.1} parent=1 // loop_footer
      %s24 = sadd.s32 1, %s20
    $region7: #{tpu_custom_call.1} parent=1 // loop_footer_branch
      %19 = sbr.rel target = $region3
    $region8: #{tpu_custom_call.1} parent=1 // loop_exit
      _
    %1065 = vsyncpa [#allocation5], 1
    %s1066 = scalar_lea.sflag [#allocation5], 1
    %1067 = vsyncpa %s1066, 1
    %1068 = vsyncpa [#allocation8], 1
    %1069 = vsyncpa [#allocation6], 1
    %s1070 = scalar_lea.sflag [#allocation6], 1
    %1071 = vsyncpa %s1070, 1

</llo_original>
